<compile_context>
chip_gen: v5e
topology: v5e:2x2
jax: 0.10.0
libtpu: 0.0.40
codegen_flags: <defaults>
</compile_context>

<pallas_src>
import functools

import jax
import jax.numpy as jnp
import numpy as np
from jax import lax
from jax.experimental import pallas as pl
from jax.experimental.pallas import tpu as pltpu

D = 18          # Walker2D state features
NUM_OUT = 5     # [total, coordinate, angle, coordinate_velocity, angular_velocity]
FOLD = 64       # batch rows folded into the lane dimension
LANES = FOLD * D  # 1152 = 9 full 128-lane tiles

# Per-feature 1/divisor (applied after the batch sum, folded into the group mat).
_SCALE = np.zeros((D,), dtype=np.float32)
_SCALE[0:2] = 1.0 / 2.5
_SCALE[2:9] = 1.0 / 0.5
_SCALE[9:11] = 1.0 / 2.0
_SCALE[11:18] = 1.0 / 2.5

# Group membership with final normalizations baked in.
_GROUP = np.zeros((D, NUM_OUT), dtype=np.float32)
_GROUP[:, 0] = 1.0 / D          # total_loss /= D
_GROUP[0:2, 1] = 1.0 / 2.0      # coordinate_loss /= 2
_GROUP[2:9, 2] = 1.0 / 7.0      # angle_loss /= 7
_GROUP[9:11, 3] = 1.0 / 2.0     # coordinate_velocity_loss /= 2
_GROUP[11:18, 4] = 1.0 / 7.0    # angular_velocity_loss /= 7

_SMALL_BATCH = 4096   # below this, a single fused XLA reduction beats a kernel launch
_MIN_KERNEL_B = 8 * FOLD  # kernel path needs >= 8 dense rows


def _round_up(x: int, m: int) -> int:
    return ((x + m - 1) // m) * m


def _device_kind() -> str:
    try:
        return jax.devices()[0].device_kind.lower()
    except Exception:  # pragma: no cover
        return ""


def _sum_sq_kernel(pred_ref, tgt_ref, sum_ref, acc_ref, *,
                   rows, tile_rows, tiles_total, tiles_per_core):
    """Accumulate per-lane sums of (pred - tgt)^2 over one (tile_rows, 1152) block."""
    c = pl.program_id(0)   # TensorCore split axis ("parallel")
    i = pl.program_id(1)   # batch-tile axis ("arbitrary", accumulator resident)

    @pl.when(i == 0)
    def _init():
        acc_ref[...] = jnp.zeros_like(acc_ref)

    t = c * tiles_per_core + i   # unclamped logical tile index (may exceed tiles_total-1)

    diff = pred_ref[...].astype(jnp.float32) - tgt_ref[...].astype(jnp.float32)

    @pl.when(t < tiles_total - 1)
    def _fast():
        # Interior tiles: no masking at all — bare sub/mul/reduce.
        acc_ref[...] += jnp.sum(diff * diff, axis=0, keepdims=True)

    @pl.when(t >= tiles_total - 1)
    def _tail():
        # Last real tile (partial rows) and any duplicated tile on the second
        # core: zero out rows past `rows` before squaring.
        ridx = t * tile_rows + lax.broadcasted_iota(jnp.int32, diff.shape, 0)
        md = jnp.where(ridx < rows, diff, 0.0)
        acc_ref[...] += jnp.sum(md * md, axis=0, keepdims=True)

    @pl.when(i == tiles_per_core - 1)
    def _store():
        sum_ref[...] = acc_ref[...]   # single lane-dense store per core


def _per_feature_sums(outputs: jax.Array, targets: jax.Array) -> jax.Array:
    """Pallas path: returns sum_b (outputs - targets)^2 per feature, shape (D,)."""
    B = outputs.shape[0]
    assert outputs.shape[1] == D, f"Walker2D expects {D} features"

    # Pad the batch to a multiple of FOLD with zeros in BOTH tensors (diff == 0
    # for padded rows, so they contribute nothing).  No-op when already aligned.
    B64 = _round_up(B, FOLD)
    if B64 != B:
        pad = ((0, B64 - B), (0, 0))
        outputs = jnp.pad(outputs, pad)
        targets = jnp.pad(targets, pad)
    rows = B64 // FOLD

    # Lane densification: (B64, 18) -> (rows, 1152); free row-major reshape.
    o2 = outputs.reshape(rows, LANES)
    t2 = targets.reshape(rows, LANES)

    # Per-generation tile sizing (f32 block bytes = tile_rows * 1152 * 4):
    #   v5e: 512 rows  ~2.25 MiB/block   v6e: 1024 ~4.5 MiB   v7x: 2048 ~9 MiB
    kind = _device_kind()
    if "v5" in kind:
        cap = 512
    elif "v7" in kind:
        cap = 2048
    else:
        cap = 1024
    tile_rows = max(8, min(cap, (rows // 8) * 8))
    tiles_total = pl.cdiv(rows, tile_rows)

    # Explicit 2-TensorCore split only where it helps (v7x); 1-TC otherwise.
    nc = 2 if ("v7" in kind and tiles_total >= 2) else 1
    tiles_per_core = pl.cdiv(tiles_total, nc)

    def in_index(c, i):
        t = c * tiles_per_core + i
        return (jnp.minimum(t, tiles_total - 1), 0)   # clamp; kernel masks extras

    kernel = functools.partial(
        _sum_sq_kernel, rows=rows, tile_rows=tile_rows,
        tiles_total=tiles_total, tiles_per_core=tiles_per_core)

    itemsize = jnp.dtype(outputs.dtype).itemsize
    cost = pl.CostEstimate(
        flops=3 * rows * LANES,
        transcendentals=0,
        bytes_accessed=2 * rows * LANES * itemsize + nc * LANES * 4)

    lane_sums = pl.pallas_call(
        kernel,
        out_shape=jax.ShapeDtypeStruct((nc, LANES), jnp.float32),
        grid_spec=pltpu.PrefetchScalarGridSpec(
            num_scalar_prefetch=0,
            grid=(nc, tiles_per_core),
            in_specs=[
                pl.BlockSpec((tile_rows, LANES), in_index),
                pl.BlockSpec((tile_rows, LANES), in_index),
            ],
            out_specs=pl.BlockSpec((1, LANES), lambda c, i: (c, 0)),
            scratch_shapes=[pltpu.VMEM((1, LANES), jnp.float32)],
        ),
        compiler_params=pltpu.CompilerParams(
            dimension_semantics=("parallel", "arbitrary"),
            vmem_limit_bytes=48 * 1024 * 1024),
        cost_estimate=cost,
    )(o2, t2)

    # Fold lanes back to features: (nc, 1152) -> (1152,) -> (64, 18) -> (18,)
    return jnp.sum(lane_sums, axis=0).reshape(FOLD, D).sum(axis=0)


def _fold_losses(per_feature_sums: jax.Array, batch: int) -> jax.Array:
    """Fold per-feature scale, 1/B mean and group norms into one (18, 5) matmul."""
    w = jnp.asarray(_SCALE[:, None] * _GROUP, dtype=jnp.float32) / batch
    return per_feature_sums @ w   # (5,)


@functools.partial(jax.jit, static_argnames=("use_kernel",))
def walker2d_losses(outputs: jax.Array, targets: jax.Array,
                    use_kernel: bool | None = None) -> jax.Array:
    """Returns (5,) f32: [total, coordinate, angle, coord_velocity, ang_velocity]."""
    B = outputs.shape[0]
    if use_kernel is None:
        use_kernel = B >= _SMALL_BATCH
    if use_kernel and B >= _MIN_KERNEL_B:
        sums = _per_feature_sums(outputs, targets)
    else:
        # Tiny batches: launch + pipeline setup dominate; one fused XLA reduce.
        diff = outputs.astype(jnp.float32) - targets.astype(jnp.float32)
        sums = jnp.sum(diff * diff, axis=0)
    return _fold_losses(sums, B)


def walker2d_loss(outputs: jax.Array, targets: jax.Array,
                  use_kernel: bool | None = None):
    """Matches Walker2DLoss.forward semantics: (total_loss, metrics dict).

    Metrics hold 0-d device arrays instead of Python floats to avoid a host
    sync (call float()/.item() on the consumer side only if truly needed).
    """
    losses = walker2d_losses(outputs, targets, use_kernel=use_kernel)
    total_loss = losses[0]
    # TODO(synk): PyTorch returns .item() host floats in `metrics`; we keep device scalars.
    metrics = {
        "coordinate_loss": losses[1],
        "orientation_loss": "N/A for Walker2D-v1",
        "angle_loss": losses[2],
        "coordinate_velocity_loss": losses[3],
        "angular_velocity_loss": losses[4],
    }
    return total_loss, metrics


def _reference(outputs, targets):
    """Float64 numpy transcription of the PyTorch loop, for a sanity check."""
    o = np.asarray(outputs, dtype=np.float64)
    t = np.asarray(targets, dtype=np.float64)
    total = coord = angle = cvel = avel = 0.0
    for i in range(o.shape[1]):
        loss = (o[:, i] - t[:, i]) ** 2
        if i in (0, 1):
            loss = loss / 2.5
            coord += loss.mean()
        elif i in (2, 3, 4, 5, 6, 7, 8):
            loss = loss / 0.5
            angle += loss.mean()
        elif i in (9, 10):
            loss = loss / 2.0
            cvel += loss.mean()
        else:
            loss = loss / 2.5
            avel += loss.mean()
        total += loss.mean()
    return np.array([total / o.shape[1], coord / 2, angle / 7, cvel / 2, avel / 7])


def _collect(total_loss, metrics):
    return np.array([
        float(total_loss),
        float(metrics["coordinate_loss"]),
        float(metrics["angle_loss"]),
        float(metrics["coordinate_velocity_loss"]),
        float(metrics["angular_velocity_loss"]),
    ])


if __name__ == "__main__":
    key = jax.random.PRNGKey(0)
    k1, k2, k3, k4 = jax.random.split(key, 4)

    # Kernel path: B not a multiple of 64 -> exercises zero-pad, partial last
    # tile and the masked-tail pl.when branch.
    B = 4133
    outputs = jax.random.normal(k1, (B, D), dtype=jnp.float32)
    targets = jax.random.normal(k2, (B, D), dtype=jnp.float32)
    total_loss, metrics = walker2d_loss(outputs, targets, use_kernel=True)
    total_loss = jax.block_until_ready(total_loss)
    np.testing.assert_allclose(_collect(total_loss, metrics),
                               _reference(outputs, targets),
                               rtol=1e-4, atol=1e-6)

    # Small-batch fallback path.
    B2 = 8
    o_small = jax.random.normal(k3, (B2, D), dtype=jnp.float32)
    t_small = jax.random.normal(k4, (B2, D), dtype=jnp.float32)
    tl2, m2 = walker2d_loss(o_small, t_small)
    tl2 = jax.block_until_ready(tl2)
    np.testing.assert_allclose(_collect(tl2, m2), _reference(o_small, t_small),
                               rtol=1e-5, atol=1e-6)

    print("KERNEL_OK")
</pallas_src>

<mosaic_0001>
module attributes {stable_mosaic.version = 11 : i64} {
  func.func @_sum_sq_kernel(%arg0: i32, %arg1: i32, %arg2: memref<64x1152xf32, #tpu.memory_space<vmem>>, %arg3: memref<64x1152xf32, #tpu.memory_space<vmem>>, %arg4: memref<1x1152xf32, #tpu.memory_space<vmem>>, %arg5: memref<1x1152xf32, #tpu.memory_space<vmem>>) attributes {dimension_semantics = [#tpu.dimension_semantics<parallel>, #tpu.dimension_semantics<arbitrary>], iteration_bounds = array<i64: 1, 2>, scalar_prefetch = 0 : i64, scratch_operands = 1 : i64, tpu.core_type = #tpu.core_type<tc>, window_params = [{transform_indices = @transform_0, window_bounds = array<i64: 64, 1152>}, {transform_indices = @transform_1, window_bounds = array<i64: 64, 1152>}, {transform_indices = @transform_2, window_bounds = array<i64: 1, 1152>}]} {
    %c0_i32 = arith.constant 0 : i32
    %0 = arith.cmpi eq, %arg1, %c0_i32 : i32
    %1 = arith.extui %0 : i1 to i32
    %c0_i32_0 = arith.constant 0 : i32
    %2 = arith.cmpi ne, %1, %c0_i32_0 : i32
    scf.if %2 {
      %cst = arith.constant 0.000000e+00 : f32
      %17 = vector.broadcast %cst : f32 to vector<1x1152xf32>
      %c0_9 = arith.constant 0 : index
      %c0_10 = arith.constant 0 : index
      %18 = vector.load %arg5[%c0_9, %c0_10] : memref<1x1152xf32, #tpu.memory_space<vmem>>, vector<1x1152xf32>
      tpu.vector_store %arg5[%c0_9, %c0_10], %17 {strides = array<i32>} : memref<1x1152xf32, #tpu.memory_space<vmem>>, vector<1x1152xf32>,
    } else {
    }
    %c2_i32 = arith.constant 2 : i32
    %3 = arith.muli %arg0, %c2_i32 : i32
    %4 = arith.addi %3, %arg1 : i32
    %c0 = arith.constant 0 : index
    %c0_1 = arith.constant 0 : index
    %5 = vector.load %arg2[%c0, %c0_1] : memref<64x1152xf32, #tpu.memory_space<vmem>>, vector<64x1152xf32>
    %c0_2 = arith.constant 0 : index
    %c0_3 = arith.constant 0 : index
    %6 = vector.load %arg3[%c0_2, %c0_3] : memref<64x1152xf32, #tpu.memory_space<vmem>>, vector<64x1152xf32>
    %7 = arith.subf %5, %6 : vector<64x1152xf32>
    %c1_i32 = arith.constant 1 : i32
    %8 = arith.cmpi slt, %4, %c1_i32 : i32
    %9 = arith.extui %8 : i1 to i32
    %c0_i32_4 = arith.constant 0 : i32
    %10 = arith.cmpi ne, %9, %c0_i32_4 : i32
    scf.if %10 {
      %c0_9 = arith.constant 0 : index
      %c0_10 = arith.constant 0 : index
      %17 = vector.load %arg5[%c0_9, %c0_10] : memref<1x1152xf32, #tpu.memory_space<vmem>>, vector<1x1152xf32>
      %18 = arith.mulf %7, %7 : vector<64x1152xf32>
      %cst = arith.constant dense<0.000000e+00> : vector<1152xf32>
      %19 = vector.multi_reduction <add>, %18, %cst [0] : vector<64x1152xf32> to vector<1152xf32>
      %20 = vector.shape_cast %19 : vector<1152xf32> to vector<1x1152xf32>
      %21 = arith.addf %17, %20 : vector<1x1152xf32>
      %c0_11 = arith.constant 0 : index
      %c0_12 = arith.constant 0 : index
      %22 = vector.load %arg5[%c0_11, %c0_12] : memref<1x1152xf32, #tpu.memory_space<vmem>>, vector<1x1152xf32>
      tpu.vector_store %arg5[%c0_11, %c0_12], %21 {strides = array<i32>} : memref<1x1152xf32, #tpu.memory_space<vmem>>, vector<1x1152xf32>,
    } else {
    }
    %c1_i32_5 = arith.constant 1 : i32
    %11 = arith.cmpi sge, %4, %c1_i32_5 : i32
    %12 = arith.extui %11 : i1 to i32
    %c0_i32_6 = arith.constant 0 : i32
    %13 = arith.cmpi ne, %12, %c0_i32_6 : i32
    scf.if %13 {
      %c64_i32 = arith.constant 64 : i32
      %17 = arith.muli %4, %c64_i32 : i32
      %18 = tpu.iota {dimensions = array<i32: 0>} : vector<64x1152xi32>
      %19 = vector.broadcast %17 : i32 to vector<64x1152xi32>
      %20 = arith.addi %19, %18 : vector<64x1152xi32>
      %c65_i32 = arith.constant 65 : i32
      %21 = vector.broadcast %c65_i32 : i32 to vector<64x1152xi32>
      %22 = arith.cmpi slt, %20, %21 : vector<64x1152xi32>
      %cst = arith.constant 0.000000e+00 : f32
      %23 = vector.broadcast %cst : f32 to vector<64x1152xf32>
      %24 = arith.select %22, %7, %23 : vector<64x1152xi1>, vector<64x1152xf32>
      %c0_9 = arith.constant 0 : index
      %c0_10 = arith.constant 0 : index
      %25 = vector.load %arg5[%c0_9, %c0_10] : memref<1x1152xf32, #tpu.memory_space<vmem>>, vector<1x1152xf32>
      %26 = arith.mulf %24, %24 : vector<64x1152xf32>
      %cst_11 = arith.constant dense<0.000000e+00> : vector<1152xf32>
      %27 = vector.multi_reduction <add>, %26, %cst_11 [0] : vector<64x1152xf32> to vector<1152xf32>
      %28 = vector.shape_cast %27 : vector<1152xf32> to vector<1x1152xf32>
      %29 = arith.addf %25, %28 : vector<1x1152xf32>
      %c0_12 = arith.constant 0 : index
      %c0_13 = arith.constant 0 : index
      %30 = vector.load %arg5[%c0_12, %c0_13] : memref<1x1152xf32, #tpu.memory_space<vmem>>, vector<1x1152xf32>
      tpu.vector_store %arg5[%c0_12, %c0_13], %29 {strides = array<i32>} : memref<1x1152xf32, #tpu.memory_space<vmem>>, vector<1x1152xf32>,
    } else {
    }
    %c1_i32_7 = arith.constant 1 : i32
    %14 = arith.cmpi eq, %arg1, %c1_i32_7 : i32
    %15 = arith.extui %14 : i1 to i32
    %c0_i32_8 = arith.constant 0 : i32
    %16 = arith.cmpi ne, %15, %c0_i32_8 : i32
    scf.if %16 {
      %c0_9 = arith.constant 0 : index
      %c0_10 = arith.constant 0 : index
      %17 = vector.load %arg5[%c0_9, %c0_10] : memref<1x1152xf32, #tpu.memory_space<vmem>>, vector<1x1152xf32>
      %c0_11 = arith.constant 0 : index
      %c0_12 = arith.constant 0 : index
      %18 = vector.load %arg4[%c0_11, %c0_12] : memref<1x1152xf32, #tpu.memory_space<vmem>>, vector<1x1152xf32>
      tpu.vector_store %arg4[%c0_11, %c0_12], %17 {strides = array<i32>} : memref<1x1152xf32, #tpu.memory_space<vmem>>, vector<1x1152xf32>,
    } else {
    }
    return
  }
  func.func @transform_0(%arg0: i32, %arg1: i32) -> (i32, i32) {
    %c2_i32 = arith.constant 2 : i32
    %0 = arith.muli %arg0, %c2_i32 : i32
    %1 = arith.addi %0, %arg1 : i32
    %c1_i32 = arith.constant 1 : i32
    %2 = arith.minsi %1, %c1_i32 : i32
    %c0_i32 = arith.constant 0 : i32
    %c0_i32_0 = arith.constant 0 : i32
    return %2, %c0_i32 : i32, i32
  }
  func.func @transform_1(%arg0: i32, %arg1: i32) -> (i32, i32) {
    %c2_i32 = arith.constant 2 : i32
    %0 = arith.muli %arg0, %c2_i32 : i32
    %1 = arith.addi %0, %arg1 : i32
    %c1_i32 = arith.constant 1 : i32
    %2 = arith.minsi %1, %c1_i32 : i32
    %c0_i32 = arith.constant 0 : i32
    %c0_i32_0 = arith.constant 0 : i32
    return %2, %c0_i32 : i32, i32
  }
  func.func @transform_2(%arg0: i32, %arg1: i32) -> (i32, i32) {
    %c0_i32 = arith.constant 0 : i32
    %c0_i32_0 = arith.constant 0 : i32
    return %arg0, %c0_i32 : i32, i32
  }
}

</mosaic_0001>

<llo_original>
// kernel: walker2d_losses.1
$region0: #{walker2d_losses.1}
  #allocation0 [shape = 'u32[]', space=smem, size = 0x4, offset = 0x4, fixed_abs, tag = 'smem constant byte address 0x4 - core index']
  #allocation1 [shape = 'u32[72,128]{1,0:T(1,128)}', space=vmem, size = 0x9000, scoped, tag = 'internal scratch']
  #allocation2 [shape = 'f32[1,1152]{1,0:T(1,128)}', space=vmem, size = 0x1200, scoped, tag = 'scratch operand']
  %s0 = inlined_call_operand.vmem [shape: f32[65,1152], index: 0, kind: input, shape index: {}]
  %s1 = inlined_call_operand.vmem [shape: f32[65,1152], index: 1, kind: input, shape index: {}]
  %s2 = inlined_call_operand.vmem [shape: f32[1,1152], index: 2, kind: output, shape index: {}]
  %s3 = sld [smem:[#allocation0]]
  $region57: #{walker2d_losses.1} parent=0
    _
  %s5 = ssub.s32 1, %s3
  %s6 = scalar_select 0, %s5, %s3
  loop: start=0, step=1, limit=4
  $region2: #{walker2d_losses.1} parent=0 // loop_pre_header
    _
  $region3: #{walker2d_losses.1} parent=0 // loop_header
    %s8 = sphi 0, %s12
    %p9 = scmp.ge.s32.totalorder %s8, 4
    %s15 = sphi 0, %s27
    %s16 = sphi 0, %s23
    %s17 = sphi 0, %s15
    %s18 = sphi 0, %s16
    %s19 = sphi 0, %s17
    %s20 = sphi 0, %s18
    %s38 = sphi 0, %s40
    %s41 = sphi 0, %s38
    %s42 = sphi 0, %s41
    %s58 = sphi 0, %s42
    %s72 = sphi 0, %s74
    %s75 = sphi 0, %s72
    %s76 = sphi 0, %s75
    %s92 = sphi 0, %s76
    %s98 = sphi 0, %s100
    %s101 = sphi 0, %s98
    %s102 = sphi 0, %s101
    %s118 = sphi 0, %s102
  $region4: #{walker2d_losses.1} parent=0 // loop_header_branch
    %11 = sbr.rel (%p9) target = $region8
  $region5: #{walker2d_losses.1} parent=0 // loop_body
    %s13 = ssub.s32 %s8, 1
    %s14 = ssub.s32 %s8, 2
    %s21 = sadd.s32 1, %s16
    %p22 = scmp.ge.s32.totalorder %s21, 2
    %s23 = scalar_select %p22, 0, %s21
    %s24 = sadd.s32 1, %s15
    %s25 = scalar_select %p22, %s24, %s15
    %p26 = scmp.ge.s32.totalorder %s25, 1
    %s27 = scalar_select %p26, 0, %s25
    %s28 = smul.u32 %s15, 2
    %s29 = sadd.s32 %s28, %s16
    %p30 = scmp.lt.s32.totalorder %s29, 1
    %s31 = scalar_select %p30, %s29, 1
    %s32 = smul.u32 %s27, 2
    %s33 = sadd.s32 %s32, %s23
    %p34 = scmp.lt.s32.totalorder %s33, 1
    %s35 = scalar_select %p34, %s33, 1
    %s36 = ssub.s32 %s31, %s35
    %p37 = scmp.eq.s32.totalorder %s36, 0
    %s39 = sadd.s32 %s38, 1
    %s40 = scalar_select %p37, %s38, %s39
    %p43 = pneg %p37
    %p44 = scmp.eq.s32.totalorder %s8, 1
    %p45 = por %p43, %p44
    %p46 = scmp.ne.s32.totalorder %s38, %s41
    %p47 = scmp.eq.s32.totalorder %s8, 0
    %p48 = por %p46, %p47
    %p49 = scmp.ne.s32.totalorder %s38, %s41
    %p50 = scmp.eq.s32.totalorder %s13, 1
    %p51 = por %p49, %p50
    %p52 = scmp.ne.s32.totalorder %s41, %s42
    %p53 = scmp.eq.s32.totalorder %s13, 0
    %p54 = por %p52, %p53
    %p55 = scmp.ne.s32.totalorder %s41, %s42
    %p56 = scmp.eq.s32.totalorder %s14, 1
    %p57 = por %p55, %p56
    %p59 = scmp.ne.s32.totalorder %s42, %s58
    %p60 = scmp.eq.s32.totalorder %s14, 0
    %p61 = por %p59, %p60
    %s62 = smul.u32 %s15, 2
    %s63 = sadd.s32 %s62, %s16
    %p64 = scmp.lt.s32.totalorder %s63, 1
    %s65 = scalar_select %p64, %s63, 1
    %s66 = smul.u32 %s27, 2
    %s67 = sadd.s32 %s66, %s23
    %p68 = scmp.lt.s32.totalorder %s67, 1
    %s69 = scalar_select %p68, %s67, 1
    %s70 = ssub.s32 %s65, %s69
    %p71 = scmp.eq.s32.totalorder %s70, 0
    %s73 = sadd.s32 %s72, 1
    %s74 = scalar_select %p71, %s72, %s73
    %p77 = pneg %p71
    %p78 = scmp.eq.s32.totalorder %s8, 1
    %p79 = por %p77, %p78
    %p80 = scmp.ne.s32.totalorder %s72, %s75
    %p81 = scmp.eq.s32.totalorder %s8, 0
    %p82 = por %p80, %p81
    %p83 = scmp.ne.s32.totalorder %s72, %s75
    %p84 = scmp.eq.s32.totalorder %s13, 1
    %p85 = por %p83, %p84
    %p86 = scmp.ne.s32.totalorder %s75, %s76
    %p87 = scmp.eq.s32.totalorder %s13, 0
    %p88 = por %p86, %p87
    %p89 = scmp.ne.s32.totalorder %s75, %s76
    %p90 = scmp.eq.s32.totalorder %s14, 1
    %p91 = por %p89, %p90
    %p93 = scmp.ne.s32.totalorder %s76, %s92
    %p94 = scmp.eq.s32.totalorder %s14, 0
    %p95 = por %p93, %p94
    %s96 = ssub.s32 %s15, %s27
    %p97 = scmp.eq.s32.totalorder %s96, 0
    %s99 = sadd.s32 %s98, 1
    %s100 = scalar_select %p97, %s98, %s99
    %p103 = pneg %p97
    %p104 = scmp.eq.s32.totalorder %s8, 1
    %p105 = por %p103, %p104
    %p106 = scmp.ne.s32.totalorder %s98, %s101
    %p107 = scmp.eq.s32.totalorder %s8, 0
    %p108 = por %p106, %p107
    %p109 = scmp.ne.s32.totalorder %s98, %s101
    %p110 = scmp.eq.s32.totalorder %s13, 1
    %p111 = por %p109, %p110
    %p112 = scmp.ne.s32.totalorder %s101, %s102
    %p113 = scmp.eq.s32.totalorder %s13, 0
    %p114 = por %p112, %p113
    %p115 = scmp.ne.s32.totalorder %s101, %s102
    %p116 = scmp.eq.s32.totalorder %s14, 1
    %p117 = por %p115, %p116
    %p119 = scmp.ne.s32.totalorder %s102, %s118
    %p120 = scmp.eq.s32.totalorder %s14, 0
    %p121 = por %p119, %p120
    %p122 = scmp.le.s32.totalorder 1, %s8
    %p123 = scmp.lt.s32.totalorder %s8, 3
    %p124 = pnand %p122, %p123
    %p125 = pneg %p124
    // Predicated region
    $region9: #{walker2d_losses.1} parent=5 // pred_check
      _
    $region10: #{walker2d_losses.1} parent=5 // pred_check_branch
      %127 = sbr.rel (%p124) target = $region12
    $region11: #{walker2d_losses.1} parent=5 // pred_region
      %s128 = ssub.s32 %s8, 1
    $region12: #{walker2d_losses.1} parent=5 // pred_fallthru
      _
    %p129 = scmp.lt.s32.totalorder %s8, 2
    // Predicated region
    $region13: #{walker2d_losses.1} parent=5 // pred_check
      %p130 = pneg %p129
    $region14: #{walker2d_losses.1} parent=5 // pred_check_branch
      %132 = sbr.rel (%p130) target = $region16
    $region15: #{walker2d_losses.1} parent=5 // pred_region
      // Predicated region
      $region17: #{walker2d_losses.1} parent=15 // pred_check
        %p133 = pneg %p48
      $region18: #{walker2d_losses.1} parent=15 // pred_check_branch
        %135 = sbr.rel (%p133) target = $region20
      $region19: #{walker2d_losses.1} parent=15 // pred_region
        %s136 = smul.u32 %s15, 2
        %s137 = sadd.s32 %s136, %s16
        %p138 = scmp.lt.s32.totalorder %s137, 1
        %s139 = scalar_select %p138, %s137, 1
        %s140 = smul.u32 8, %s139
        %s141 = ssub.s32 9, %s140
        %p142 = scmp.lt.s32.totalorder %s141, 8
        %s143 = scalar_select %p142, %s141, 8
        %s144 = smul.u32 8, %s143
        %s145 = smul.u32 %s144, 9
        %p146 = scmp.lt.s32.totalorder %s140, 8
        %s147 = scalar_select %p146, %s140, 8
        %s148 = smul.addr %s147, 9
        %s149 = smul.addr %s148, 8
        %s150 = scalar_lea.vmem %s0, %s149
        %s151 = smul.u32 %s15, 2
        %s152 = sadd.s32 %s151, %s16
        %p153 = scmp.lt.s32.totalorder %s152, 1
        %s154 = scalar_select %p153, %s152, 1
        %s155 = smul.u32 8, %s154
        %s156 = ssub.s32 9, %s155
        %p157 = scmp.lt.s32.totalorder %s156, 8
        %s158 = scalar_select %p157, %s156, 8
        %s159 = smul.u32 8, %s158
        %s160 = smul.u32 %s159, 9
      $region20: #{walker2d_losses.1} parent=15 // pred_fallthru
        _
      // Predicated region
      $region21: #{walker2d_losses.1} parent=15 // pred_check
        %p161 = pneg %p82
      $region22: #{walker2d_losses.1} parent=15 // pred_check_branch
        %163 = sbr.rel (%p161) target = $region24
      $region23: #{walker2d_losses.1} parent=15 // pred_region
        %s164 = smul.u32 %s15, 2
        %s165 = sadd.s32 %s164, %s16
        %p166 = scmp.lt.s32.totalorder %s165, 1
        %s167 = scalar_select %p166, %s165, 1
        %s168 = smul.u32 8, %s167
        %s169 = ssub.s32 9, %s168
        %p170 = scmp.lt.s32.totalorder %s169, 8
        %s171 = scalar_select %p170, %s169, 8
        %s172 = smul.u32 8, %s171
        %s173 = smul.u32 %s172, 9
        %p174 = scmp.lt.s32.totalorder %s168, 8
        %s175 = scalar_select %p174, %s168, 8
        %s176 = smul.addr %s175, 9
        %s177 = smul.addr %s176, 8
        %s178 = scalar_lea.vmem %s1, %s177
        %s179 = smul.u32 %s15, 2
        %s180 = sadd.s32 %s179, %s16
        %p181 = scmp.lt.s32.totalorder %s180, 1
        %s182 = scalar_select %p181, %s180, 1
        %s183 = smul.u32 8, %s182
        %s184 = ssub.s32 9, %s183
        %p185 = scmp.lt.s32.totalorder %s184, 8
        %s186 = scalar_select %p185, %s184, 8
        %s187 = smul.u32 8, %s186
        %s188 = smul.u32 %s187, 9
      $region24: #{walker2d_losses.1} parent=15 // pred_fallthru
        _
    $region16: #{walker2d_losses.1} parent=5 // pred_fallthru
      _
    %p189 = scmp.le.s32.totalorder 1, %s8
    %p190 = scmp.lt.s32.totalorder %s8, 3
    %p191 = pnand %p189, %p190
    %p192 = pneg %p191
    // Predicated region
    $region25: #{walker2d_losses.1} parent=5 // pred_check
      _
    $region26: #{walker2d_losses.1} parent=5 // pred_check_branch
      %194 = sbr.rel (%p191) target = $region28
    $region27: #{walker2d_losses.1} parent=5 // pred_region
      %s195 = ssub.s32 %s8, 1
      %s196 = smul.u32 %s17, 2
      %s197 = sadd.s32 %s196, %s18
      %p198 = scmp.lt.s32.totalorder %s197, 1
      %s199 = scalar_select %p198, %s197, 1
      %s200 = smul.u32 8, %s199
      %s201 = ssub.s32 9, %s200
      %p202 = scmp.lt.s32.totalorder %s201, 8
      %s203 = scalar_select %p202, %s201, 8
      %s204 = smul.u32 8, %s203
      %s205 = smul.u32 %s204, 9
      %p206 = scmp.lt.s32.totalorder %s200, 8
      %s207 = scalar_select %p206, %s200, 8
      %s208 = smul.addr %s207, 9
      %s209 = smul.addr %s208, 8
      %s210 = scalar_lea.vmem %s0, %s209
      %p211 = pneg %p54
      %p212 = pneg %p51
      %s213 = smul.u32 %s17, 2
      %s214 = sadd.s32 %s213, %s18
      %p215 = scmp.lt.s32.totalorder %s214, 1
      %s216 = scalar_select %p215, %s214, 1
      %s217 = smul.u32 8, %s216
      %s218 = ssub.s32 9, %s217
      %p219 = scmp.lt.s32.totalorder %s218, 8
      %s220 = scalar_select %p219, %s218, 8
      %s221 = smul.u32 8, %s220
      %s222 = smul.u32 %s221, 9
      %p223 = scmp.lt.s32.totalorder %s217, 8
      %s224 = scalar_select %p223, %s217, 8
      %s225 = smul.addr %s224, 9
      %s226 = smul.addr %s225, 8
      %s227 = scalar_lea.vmem %s1, %s226
      %p228 = pneg %p88
      %p229 = pneg %p85
      %p230 = pneg %p114
      %p231 = pneg %p111
      %p232 = scmp.lt.s32.totalorder %s17, 0
      %s233 = scalar_select %p232, %s17, 0
      %s234 = smul.addr %s233, 9
      %s235 = scalar_lea.vmem %s2, %s234
      %s236 = smul.u32 %s17, 2
      %s237 = sadd.s32 %s236, %s18
      %p238 = scmp.lt.s32.totalorder %s237, 1
      %s239 = scalar_select %p238, %s237, 1
      %s240 = smul.u32 8, %s239
      %s241 = ssub.s32 9, %s240
      %p242 = scmp.lt.s32.totalorder %s241, 8
      %s243 = scalar_select %p242, %s241, 8
      %s244 = smul.u32 8, %s243
      %s245 = smul.u32 %s244, 9
      %p246 = scmp.lt.s32.totalorder %s240, 8
      %s247 = scalar_select %p246, %s240, 8
      %s248 = smul.addr %s247, 9
      %s249 = smul.addr %s248, 8
      %s250 = scalar_lea.vmem %s0, %s249
      %s251 = smul.u32 %s17, 2
      %s252 = sadd.s32 %s251, %s18
      %p253 = scmp.lt.s32.totalorder %s252, 1
      %s254 = scalar_select %p253, %s252, 1
      %s255 = smul.u32 8, %s254
      %s256 = ssub.s32 9, %s255
      %p257 = scmp.lt.s32.totalorder %s256, 8
      %s258 = scalar_select %p257, %s256, 8
      %s259 = smul.u32 8, %s258
      %s260 = smul.u32 %s259, 9
      %s261 = smul.u32 %s17, 2
      %s262 = sadd.s32 %s261, %s18
      %p263 = scmp.lt.s32.totalorder %s262, 1
      %s264 = scalar_select %p263, %s262, 1
      %s265 = smul.u32 8, %s264
      %s266 = ssub.s32 9, %s265
      %p267 = scmp.lt.s32.totalorder %s266, 8
      %s268 = scalar_select %p267, %s266, 8
      %s269 = smul.u32 8, %s268
      %s270 = smul.u32 %s269, 9
      %p271 = scmp.lt.s32.totalorder %s265, 8
      %s272 = scalar_select %p271, %s265, 8
      %s273 = smul.addr %s272, 9
      %s274 = smul.addr %s273, 8
      %s275 = scalar_lea.vmem %s1, %s274
      %s276 = smul.u32 %s17, 2
      %s277 = sadd.s32 %s276, %s18
      %p278 = scmp.lt.s32.totalorder %s277, 1
      %s279 = scalar_select %p278, %s277, 1
      %s280 = smul.u32 8, %s279
      %s281 = ssub.s32 9, %s280
      %p282 = scmp.lt.s32.totalorder %s281, 8
      %s283 = scalar_select %p282, %s281, 8
      %s284 = smul.u32 8, %s283
      %s285 = smul.u32 %s284, 9
      %p286 = scmp.lt.s32.totalorder %s17, 0
      %s287 = scalar_select %p286, %s17, 0
      %s288 = smul.addr %s287, 9
      %s289 = scalar_lea.vmem %s2, %s288
      %p290 = scmp.eq.s32.totalorder %s18, 0
      // Predicated region
      $region29: #{walker2d_losses.1} parent=27 // pred_check
        %p291 = pneg %p290
      $region30: #{walker2d_losses.1} parent=27 // pred_check_branch
        %293 = sbr.rel (%p291) target = $region32
      $region31: #{walker2d_losses.1} parent=27 // pred_region
        %294 = vst [vmem:[#allocation2] sm:$0xff] 0.0
        %v295 = vlaneseq
        %vm296 = vcmp.ge.s32.totalorder %v295, 0
        %vm297 = vcmp.lt.s32.totalorder %v295, 128
        %vm298 = vmand %vm296, %vm297
        %299 = vst.msk [vmem:[#allocation2 + $0x8] sm:$0x1] %vm298, 0.0
      $region32: #{walker2d_losses.1} parent=27 // pred_fallthru
        _
      %s300 = smul.u32 %s17, 2
      %s301 = sadd.s32 %s300, %s18
      %v302 = vld [vmem:[%s250] sm:$0xff]
      %v303 = vld [vmem:[%s250 + $0x8] sm:$0xff]
      %v304 = vld [vmem:[%s250 + $0x10] sm:$0xff]
      %v305 = vld [vmem:[%s250 + $0x18] sm:$0xff]
      %v306 = vld [vmem:[%s250 + $0x20] sm:$0xff]
      %v307 = vld [vmem:[%s250 + $0x28] sm:$0xff]
      %v308 = vld [vmem:[%s250 + $0x30] sm:$0xff]
      %v309 = vld [vmem:[%s250 + $0x38] sm:$0xff]
      %v310 = vld [vmem:[%s250 + $0x40] sm:$0xff]
      %v311 = vld [vmem:[%s250 + $0x48] sm:$0xff]
      %v312 = vld [vmem:[%s250 + $0x50] sm:$0xff]
      %v313 = vld [vmem:[%s250 + $0x58] sm:$0xff]
      %v314 = vld [vmem:[%s250 + $0x60] sm:$0xff]
      %v315 = vld [vmem:[%s250 + $0x68] sm:$0xff]
      %v316 = vld [vmem:[%s250 + $0x70] sm:$0xff]
      %v317 = vld [vmem:[%s250 + $0x78] sm:$0xff]
      %v318 = vld [vmem:[%s250 + $0x80] sm:$0xff]
      %v319 = vld [vmem:[%s250 + $0x88] sm:$0xff]
      %v320 = vld [vmem:[%s250 + $0x90] sm:$0xff]
      %v321 = vld [vmem:[%s250 + $0x98] sm:$0xff]
      %v322 = vld [vmem:[%s250 + $0xa0] sm:$0xff]
      %v323 = vld [vmem:[%s250 + $0xa8] sm:$0xff]
      %v324 = vld [vmem:[%s250 + $0xb0] sm:$0xff]
      %v325 = vld [vmem:[%s250 + $0xb8] sm:$0xff]
      %v326 = vld [vmem:[%s250 + $0xc0] sm:$0xff]
      %v327 = vld [vmem:[%s250 + $0xc8] sm:$0xff]
      %v328 = vld [vmem:[%s250 + $0xd0] sm:$0xff]
      %v329 = vld [vmem:[%s250 + $0xd8] sm:$0xff]
      %v330 = vld [vmem:[%s250 + $0xe0] sm:$0xff]
      %v331 = vld [vmem:[%s250 + $0xe8] sm:$0xff]
      %v332 = vld [vmem:[%s250 + $0xf0] sm:$0xff]
      %v333 = vld [vmem:[%s250 + $0xf8] sm:$0xff]
      %v334 = vld [vmem:[%s250 + $0x100] sm:$0xff]
      %v335 = vld [vmem:[%s250 + $0x108] sm:$0xff]
      %v336 = vld [vmem:[%s250 + $0x110] sm:$0xff]
      %v337 = vld [vmem:[%s250 + $0x118] sm:$0xff]
      %v338 = vld [vmem:[%s250 + $0x120] sm:$0xff]
      %v339 = vld [vmem:[%s250 + $0x128] sm:$0xff]
      %v340 = vld [vmem:[%s250 + $0x130] sm:$0xff]
      %v341 = vld [vmem:[%s250 + $0x138] sm:$0xff]
      %v342 = vld [vmem:[%s250 + $0x140] sm:$0xff]
      %v343 = vld [vmem:[%s250 + $0x148] sm:$0xff]
      %v344 = vld [vmem:[%s250 + $0x150] sm:$0xff]
      %v345 = vld [vmem:[%s250 + $0x158] sm:$0xff]
      %v346 = vld [vmem:[%s250 + $0x160] sm:$0xff]
      %v347 = vld [vmem:[%s250 + $0x168] sm:$0xff]
      %v348 = vld [vmem:[%s250 + $0x170] sm:$0xff]
      %v349 = vld [vmem:[%s250 + $0x178] sm:$0xff]
      %v350 = vld [vmem:[%s250 + $0x180] sm:$0xff]
      %v351 = vld [vmem:[%s250 + $0x188] sm:$0xff]
      %v352 = vld [vmem:[%s250 + $0x190] sm:$0xff]
      %v353 = vld [vmem:[%s250 + $0x198] sm:$0xff]
      %v354 = vld [vmem:[%s250 + $0x1a0] sm:$0xff]
      %v355 = vld [vmem:[%s250 + $0x1a8] sm:$0xff]
      %v356 = vld [vmem:[%s250 + $0x1b0] sm:$0xff]
      %v357 = vld [vmem:[%s250 + $0x1b8] sm:$0xff]
      %v358 = vld [vmem:[%s250 + $0x1c0] sm:$0xff]
      %v359 = vld [vmem:[%s250 + $0x1c8] sm:$0xff]
      %v360 = vld [vmem:[%s250 + $0x1d0] sm:$0xff]
      %v361 = vld [vmem:[%s250 + $0x1d8] sm:$0xff]
      %v362 = vld [vmem:[%s250 + $0x1e0] sm:$0xff]
      %v363 = vld [vmem:[%s250 + $0x1e8] sm:$0xff]
      %v364 = vld [vmem:[%s250 + $0x1f0] sm:$0xff]
      %v365 = vld [vmem:[%s250 + $0x1f8] sm:$0xff]
      %v366 = vld [vmem:[%s250 + $0x200] sm:$0xff]
      %v367 = vld [vmem:[%s250 + $0x208] sm:$0xff]
      %v368 = vld [vmem:[%s250 + $0x210] sm:$0xff]
      %v369 = vld [vmem:[%s250 + $0x218] sm:$0xff]
      %v370 = vld [vmem:[%s250 + $0x220] sm:$0xff]
      %v371 = vld [vmem:[%s250 + $0x228] sm:$0xff]
      %v372 = vld [vmem:[%s250 + $0x230] sm:$0xff]
      %v373 = vld [vmem:[%s250 + $0x238] sm:$0xff]
      %v374 = vld [vmem:[%s275] sm:$0xff]
      %v375 = vld [vmem:[%s275 + $0x8] sm:$0xff]
      %v376 = vld [vmem:[%s275 + $0x10] sm:$0xff]
      %v377 = vld [vmem:[%s275 + $0x18] sm:$0xff]
      %v378 = vld [vmem:[%s275 + $0x20] sm:$0xff]
      %v379 = vld [vmem:[%s275 + $0x28] sm:$0xff]
      %v380 = vld [vmem:[%s275 + $0x30] sm:$0xff]
      %v381 = vld [vmem:[%s275 + $0x38] sm:$0xff]
      %v382 = vld [vmem:[%s275 + $0x40] sm:$0xff]
      %v383 = vld [vmem:[%s275 + $0x48] sm:$0xff]
      %v384 = vld [vmem:[%s275 + $0x50] sm:$0xff]
      %v385 = vld [vmem:[%s275 + $0x58] sm:$0xff]
      %v386 = vld [vmem:[%s275 + $0x60] sm:$0xff]
      %v387 = vld [vmem:[%s275 + $0x68] sm:$0xff]
      %v388 = vld [vmem:[%s275 + $0x70] sm:$0xff]
      %v389 = vld [vmem:[%s275 + $0x78] sm:$0xff]
      %v390 = vld [vmem:[%s275 + $0x80] sm:$0xff]
      %v391 = vld [vmem:[%s275 + $0x88] sm:$0xff]
      %v392 = vld [vmem:[%s275 + $0x90] sm:$0xff]
      %v393 = vld [vmem:[%s275 + $0x98] sm:$0xff]
      %v394 = vld [vmem:[%s275 + $0xa0] sm:$0xff]
      %v395 = vld [vmem:[%s275 + $0xa8] sm:$0xff]
      %v396 = vld [vmem:[%s275 + $0xb0] sm:$0xff]
      %v397 = vld [vmem:[%s275 + $0xb8] sm:$0xff]
      %v398 = vld [vmem:[%s275 + $0xc0] sm:$0xff]
      %v399 = vld [vmem:[%s275 + $0xc8] sm:$0xff]
      %v400 = vld [vmem:[%s275 + $0xd0] sm:$0xff]
      %v401 = vld [vmem:[%s275 + $0xd8] sm:$0xff]
      %v402 = vld [vmem:[%s275 + $0xe0] sm:$0xff]
      %v403 = vld [vmem:[%s275 + $0xe8] sm:$0xff]
      %v404 = vld [vmem:[%s275 + $0xf0] sm:$0xff]
      %v405 = vld [vmem:[%s275 + $0xf8] sm:$0xff]
      %v406 = vld [vmem:[%s275 + $0x100] sm:$0xff]
      %v407 = vld [vmem:[%s275 + $0x108] sm:$0xff]
      %v408 = vld [vmem:[%s275 + $0x110] sm:$0xff]
      %v409 = vld [vmem:[%s275 + $0x118] sm:$0xff]
      %v410 = vld [vmem:[%s275 + $0x120] sm:$0xff]
      %v411 = vld [vmem:[%s275 + $0x128] sm:$0xff]
      %v412 = vld [vmem:[%s275 + $0x130] sm:$0xff]
      %v413 = vld [vmem:[%s275 + $0x138] sm:$0xff]
      %v414 = vld [vmem:[%s275 + $0x140] sm:$0xff]
      %v415 = vld [vmem:[%s275 + $0x148] sm:$0xff]
      %v416 = vld [vmem:[%s275 + $0x150] sm:$0xff]
      %v417 = vld [vmem:[%s275 + $0x158] sm:$0xff]
      %v418 = vld [vmem:[%s275 + $0x160] sm:$0xff]
      %v419 = vld [vmem:[%s275 + $0x168] sm:$0xff]
      %v420 = vld [vmem:[%s275 + $0x170] sm:$0xff]
      %v421 = vld [vmem:[%s275 + $0x178] sm:$0xff]
      %v422 = vld [vmem:[%s275 + $0x180] sm:$0xff]
      %v423 = vld [vmem:[%s275 + $0x188] sm:$0xff]
      %v424 = vld [vmem:[%s275 + $0x190] sm:$0xff]
      %v425 = vld [vmem:[%s275 + $0x198] sm:$0xff]
      %v426 = vld [vmem:[%s275 + $0x1a0] sm:$0xff]
      %v427 = vld [vmem:[%s275 + $0x1a8] sm:$0xff]
      %v428 = vld [vmem:[%s275 + $0x1b0] sm:$0xff]
      %v429 = vld [vmem:[%s275 + $0x1b8] sm:$0xff]
      %v430 = vld [vmem:[%s275 + $0x1c0] sm:$0xff]
      %v431 = vld [vmem:[%s275 + $0x1c8] sm:$0xff]
      %v432 = vld [vmem:[%s275 + $0x1d0] sm:$0xff]
      %v433 = vld [vmem:[%s275 + $0x1d8] sm:$0xff]
      %v434 = vld [vmem:[%s275 + $0x1e0] sm:$0xff]
      %v435 = vld [vmem:[%s275 + $0x1e8] sm:$0xff]
      %v436 = vld [vmem:[%s275 + $0x1f0] sm:$0xff]
      %v437 = vld [vmem:[%s275 + $0x1f8] sm:$0xff]
      %v438 = vld [vmem:[%s275 + $0x200] sm:$0xff]
      %v439 = vld [vmem:[%s275 + $0x208] sm:$0xff]
      %v440 = vld [vmem:[%s275 + $0x210] sm:$0xff]
      %v441 = vld [vmem:[%s275 + $0x218] sm:$0xff]
      %v442 = vld [vmem:[%s275 + $0x220] sm:$0xff]
      %v443 = vld [vmem:[%s275 + $0x228] sm:$0xff]
      %v444 = vld [vmem:[%s275 + $0x230] sm:$0xff]
      %v445 = vld [vmem:[%s275 + $0x238] sm:$0xff]
      %v446 = vsub.f32 %v302, %v374
      %v447 = vsub.f32 %v303, %v375
      %v448 = vsub.f32 %v304, %v376
      %v449 = vsub.f32 %v305, %v377
      %v450 = vsub.f32 %v306, %v378
      %v451 = vsub.f32 %v307, %v379
      %v452 = vsub.f32 %v308, %v380
      %v453 = vsub.f32 %v309, %v381
      %v454 = vsub.f32 %v310, %v382
      %v455 = vsub.f32 %v311, %v383
      %v456 = vsub.f32 %v312, %v384
      %v457 = vsub.f32 %v313, %v385
      %v458 = vsub.f32 %v314, %v386
      %v459 = vsub.f32 %v315, %v387
      %v460 = vsub.f32 %v316, %v388
      %v461 = vsub.f32 %v317, %v389
      %v462 = vsub.f32 %v318, %v390
      %v463 = vsub.f32 %v319, %v391
      %v464 = vsub.f32 %v320, %v392
      %v465 = vsub.f32 %v321, %v393
      %v466 = vsub.f32 %v322, %v394
      %v467 = vsub.f32 %v323, %v395
      %v468 = vsub.f32 %v324, %v396
      %v469 = vsub.f32 %v325, %v397
      %v470 = vsub.f32 %v326, %v398
      %v471 = vsub.f32 %v327, %v399
      %v472 = vsub.f32 %v328, %v400
      %v473 = vsub.f32 %v329, %v401
      %v474 = vsub.f32 %v330, %v402
      %v475 = vsub.f32 %v331, %v403
      %v476 = vsub.f32 %v332, %v404
      %v477 = vsub.f32 %v333, %v405
      %v478 = vsub.f32 %v334, %v406
      %v479 = vsub.f32 %v335, %v407
      %v480 = vsub.f32 %v336, %v408
      %v481 = vsub.f32 %v337, %v409
      %v482 = vsub.f32 %v338, %v410
      %v483 = vsub.f32 %v339, %v411
      %v484 = vsub.f32 %v340, %v412
      %v485 = vsub.f32 %v341, %v413
      %v486 = vsub.f32 %v342, %v414
      %v487 = vsub.f32 %v343, %v415
      %v488 = vsub.f32 %v344, %v416
      %v489 = vsub.f32 %v345, %v417
      %v490 = vsub.f32 %v346, %v418
      %v491 = vsub.f32 %v347, %v419
      %v492 = vsub.f32 %v348, %v420
      %v493 = vsub.f32 %v349, %v421
      %v494 = vsub.f32 %v350, %v422
      %v495 = vsub.f32 %v351, %v423
      %v496 = vsub.f32 %v352, %v424
      %v497 = vsub.f32 %v353, %v425
      %v498 = vsub.f32 %v354, %v426
      %v499 = vsub.f32 %v355, %v427
      %v500 = vsub.f32 %v356, %v428
      %v501 = vsub.f32 %v357, %v429
      %v502 = vsub.f32 %v358, %v430
      %v503 = vsub.f32 %v359, %v431
      %v504 = vsub.f32 %v360, %v432
      %v505 = vsub.f32 %v361, %v433
      %v506 = vsub.f32 %v362, %v434
      %v507 = vsub.f32 %v363, %v435
      %v508 = vsub.f32 %v364, %v436
      %v509 = vsub.f32 %v365, %v437
      %v510 = vsub.f32 %v366, %v438
      %v511 = vsub.f32 %v367, %v439
      %v512 = vsub.f32 %v368, %v440
      %v513 = vsub.f32 %v369, %v441
      %v514 = vsub.f32 %v370, %v442
      %v515 = vsub.f32 %v371, %v443
      %v516 = vsub.f32 %v372, %v444
      %v517 = vsub.f32 %v373, %v445
      %p518 = scmp.lt.s32.totalorder %s301, 1
      // Predicated region
      $region33: #{walker2d_losses.1} parent=27 // pred_check
        %p519 = pneg %p518
      $region34: #{walker2d_losses.1} parent=27 // pred_check_branch
        %521 = sbr.rel (%p519) target = $region36
      $region35: #{walker2d_losses.1} parent=27 // pred_region
        %v522 = vld [vmem:[#allocation2] sm:$0xff]
        %v523 = vld [vmem:[#allocation2 + $0x8] sm:$0x1]
        %v524 = vmul.f32 %v446, %v446
        %v525 = vmul.f32 %v447, %v447
        %v526 = vmul.f32 %v448, %v448
        %v527 = vmul.f32 %v449, %v449
        %v528 = vmul.f32 %v450, %v450
        %v529 = vmul.f32 %v451, %v451
        %v530 = vmul.f32 %v452, %v452
        %v531 = vmul.f32 %v453, %v453
        %v532 = vmul.f32 %v454, %v454
        %v533 = vmul.f32 %v455, %v455
        %v534 = vmul.f32 %v456, %v456
        %v535 = vmul.f32 %v457, %v457
        %v536 = vmul.f32 %v458, %v458
        %v537 = vmul.f32 %v459, %v459
        %v538 = vmul.f32 %v460, %v460
        %v539 = vmul.f32 %v461, %v461
        %v540 = vmul.f32 %v462, %v462
        %v541 = vmul.f32 %v463, %v463
        %v542 = vmul.f32 %v464, %v464
        %v543 = vmul.f32 %v465, %v465
        %v544 = vmul.f32 %v466, %v466
        %v545 = vmul.f32 %v467, %v467
        %v546 = vmul.f32 %v468, %v468
        %v547 = vmul.f32 %v469, %v469
        %v548 = vmul.f32 %v470, %v470
        %v549 = vmul.f32 %v471, %v471
        %v550 = vmul.f32 %v472, %v472
        %v551 = vmul.f32 %v473, %v473
        %v552 = vmul.f32 %v474, %v474
        %v553 = vmul.f32 %v475, %v475
        %v554 = vmul.f32 %v476, %v476
        %v555 = vmul.f32 %v477, %v477
        %v556 = vmul.f32 %v478, %v478
        %v557 = vmul.f32 %v479, %v479
        %v558 = vmul.f32 %v480, %v480
        %v559 = vmul.f32 %v481, %v481
        %v560 = vmul.f32 %v482, %v482
        %v561 = vmul.f32 %v483, %v483
        %v562 = vmul.f32 %v484, %v484
        %v563 = vmul.f32 %v485, %v485
        %v564 = vmul.f32 %v486, %v486
        %v565 = vmul.f32 %v487, %v487
        %v566 = vmul.f32 %v488, %v488
        %v567 = vmul.f32 %v489, %v489
        %v568 = vmul.f32 %v490, %v490
        %v569 = vmul.f32 %v491, %v491
        %v570 = vmul.f32 %v492, %v492
        %v571 = vmul.f32 %v493, %v493
        %v572 = vmul.f32 %v494, %v494
        %v573 = vmul.f32 %v495, %v495
        %v574 = vmul.f32 %v496, %v496
        %v575 = vmul.f32 %v497, %v497
        %v576 = vmul.f32 %v498, %v498
        %v577 = vmul.f32 %v499, %v499
        %v578 = vmul.f32 %v500, %v500
        %v579 = vmul.f32 %v501, %v501
        %v580 = vmul.f32 %v502, %v502
        %v581 = vmul.f32 %v503, %v503
        %v582 = vmul.f32 %v504, %v504
        %v583 = vmul.f32 %v505, %v505
        %v584 = vmul.f32 %v506, %v506
        %v585 = vmul.f32 %v507, %v507
        %v586 = vmul.f32 %v508, %v508
        %v587 = vmul.f32 %v509, %v509
        %v588 = vmul.f32 %v510, %v510
        %v589 = vmul.f32 %v511, %v511
        %v590 = vmul.f32 %v512, %v512
        %v591 = vmul.f32 %v513, %v513
        %v592 = vmul.f32 %v514, %v514
        %v593 = vmul.f32 %v515, %v515
        %v594 = vmul.f32 %v516, %v516
        %v595 = vmul.f32 %v517, %v517
        %v596 = vadd.f32 %v524, %v533
        %v597 = vadd.f32 %v596, %v542
        %v598 = vadd.f32 %v597, %v551
        %v599 = vadd.f32 %v598, %v560
        %v600 = vadd.f32 %v599, %v569
        %v601 = vadd.f32 %v600, %v578
        %v602 = vadd.f32 %v601, %v587
        %v603 = vrot.slane %v602, 4
        %v604 = vadd.f32 %v602, %v603
        %v605 = vrot.slane %v604, 2
        %v606 = vadd.f32 %v604, %v605
        %v607 = vrot.slane %v606, 1
        %v608 = vadd.f32 %v606, %v607
        %v609 = vadd.f32 %v525, %v534
        %v610 = vadd.f32 %v609, %v543
        %v611 = vadd.f32 %v610, %v552
        %v612 = vadd.f32 %v611, %v561
        %v613 = vadd.f32 %v612, %v570
        %v614 = vadd.f32 %v613, %v579
        %v615 = vadd.f32 %v614, %v588
        %v616 = vrot.slane %v615, 4
        %v617 = vadd.f32 %v615, %v616
        %v618 = vrot.slane %v617, 2
        %v619 = vadd.f32 %v617, %v618
        %v620 = vrot.slane %v619, 1
        %v621 = vadd.f32 %v619, %v620
        %v622 = vadd.f32 %v526, %v535
        %v623 = vadd.f32 %v622, %v544
        %v624 = vadd.f32 %v623, %v553
        %v625 = vadd.f32 %v624, %v562
        %v626 = vadd.f32 %v625, %v571
        %v627 = vadd.f32 %v626, %v580
        %v628 = vadd.f32 %v627, %v589
        %v629 = vrot.slane %v628, 4
        %v630 = vadd.f32 %v628, %v629
        %v631 = vrot.slane %v630, 2
        %v632 = vadd.f32 %v630, %v631
        %v633 = vrot.slane %v632, 1
        %v634 = vadd.f32 %v632, %v633
        %v635 = vadd.f32 %v527, %v536
        %v636 = vadd.f32 %v635, %v545
        %v637 = vadd.f32 %v636, %v554
        %v638 = vadd.f32 %v637, %v563
        %v639 = vadd.f32 %v638, %v572
        %v640 = vadd.f32 %v639, %v581
        %v641 = vadd.f32 %v640, %v590
        %v642 = vrot.slane %v641, 4
        %v643 = vadd.f32 %v641, %v642
        %v644 = vrot.slane %v643, 2
        %v645 = vadd.f32 %v643, %v644
        %v646 = vrot.slane %v645, 1
        %v647 = vadd.f32 %v645, %v646
        %v648 = vadd.f32 %v528, %v537
        %v649 = vadd.f32 %v648, %v546
        %v650 = vadd.f32 %v649, %v555
        %v651 = vadd.f32 %v650, %v564
        %v652 = vadd.f32 %v651, %v573
        %v653 = vadd.f32 %v652, %v582
        %v654 = vadd.f32 %v653, %v591
        %v655 = vrot.slane %v654, 4
        %v656 = vadd.f32 %v654, %v655
        %v657 = vrot.slane %v656, 2
        %v658 = vadd.f32 %v656, %v657
        %v659 = vrot.slane %v658, 1
        %v660 = vadd.f32 %v658, %v659
        %v661 = vadd.f32 %v529, %v538
        %v662 = vadd.f32 %v661, %v547
        %v663 = vadd.f32 %v662, %v556
        %v664 = vadd.f32 %v663, %v565
        %v665 = vadd.f32 %v664, %v574
        %v666 = vadd.f32 %v665, %v583
        %v667 = vadd.f32 %v666, %v592
        %v668 = vrot.slane %v667, 4
        %v669 = vadd.f32 %v667, %v668
        %v670 = vrot.slane %v669, 2
        %v671 = vadd.f32 %v669, %v670
        %v672 = vrot.slane %v671, 1
        %v673 = vadd.f32 %v671, %v672
        %v674 = vadd.f32 %v530, %v539
        %v675 = vadd.f32 %v674, %v548
        %v676 = vadd.f32 %v675, %v557
        %v677 = vadd.f32 %v676, %v566
        %v678 = vadd.f32 %v677, %v575
        %v679 = vadd.f32 %v678, %v584
        %v680 = vadd.f32 %v679, %v593
        %v681 = vrot.slane %v680, 4
        %v682 = vadd.f32 %v680, %v681
        %v683 = vrot.slane %v682, 2
        %v684 = vadd.f32 %v682, %v683
        %v685 = vrot.slane %v684, 1
        %v686 = vadd.f32 %v684, %v685
        %v687 = vadd.f32 %v531, %v540
        %v688 = vadd.f32 %v687, %v549
        %v689 = vadd.f32 %v688, %v558
        %v690 = vadd.f32 %v689, %v567
        %v691 = vadd.f32 %v690, %v576
        %v692 = vadd.f32 %v691, %v585
        %v693 = vadd.f32 %v692, %v594
        %v694 = vrot.slane %v693, 4
        %v695 = vadd.f32 %v693, %v694
        %v696 = vrot.slane %v695, 2
        %v697 = vadd.f32 %v695, %v696
        %v698 = vrot.slane %v697, 1
        %v699 = vadd.f32 %v697, %v698
        %v700 = vadd.f32 %v532, %v541
        %v701 = vadd.f32 %v700, %v550
        %v702 = vadd.f32 %v701, %v559
        %v703 = vadd.f32 %v702, %v568
        %v704 = vadd.f32 %v703, %v577
        %v705 = vadd.f32 %v704, %v586
        %v706 = vadd.f32 %v705, %v595
        %v707 = vrot.slane %v706, 4
        %v708 = vadd.f32 %v706, %v707
        %v709 = vrot.slane %v708, 2
        %v710 = vadd.f32 %v708, %v709
        %v711 = vrot.slane %v710, 1
        %v712 = vadd.f32 %v710, %v711
        %v721 = vrot.slane %v621, 7
        %v722 = vrot.slane %v634, 6
        %v723 = vrot.slane %v647, 5
        %v724 = vrot.slane %v660, 4
        %v725 = vrot.slane %v673, 3
        %v726 = vrot.slane %v686, 2
        %v727 = vrot.slane %v699, 1
        %vm728 = vcmask 1040384
        %v729 = vsel %vm728, %v608, %v721
        %vm730 = vcmask 1042434
        %v731 = vsel %vm730, %v722, %v723
        %vm732 = vcmask 1041408
        %v733 = vsel %vm732, %v729, %v731
        %vm734 = vcmask 1044484
        %v735 = vsel %vm734, %v724, %v725
        %vm736 = vcmask 1046534
        %v737 = vsel %vm736, %v726, %v727
        %vm738 = vcmask 1045508
        %v739 = vsel %vm738, %v735, %v737
        %vm740 = vcmask 1043456
        %v741 = vsel %vm740, %v733, %v739
        %v743 = vadd.f32 %v522, %v741
        %v744 = vadd.f32 %v523, %v712
        %745 = vst [vmem:[#allocation2] sm:$0xff] %v743
        %v746 = vlaneseq
        %vm747 = vcmp.ge.s32.totalorder %v746, 0
        %vm748 = vcmp.lt.s32.totalorder %v746, 128
        %vm749 = vmand %vm747, %vm748
        %750 = vst.msk [vmem:[#allocation2 + $0x8] sm:$0x1] %vm749, %v744
      $region36: #{walker2d_losses.1} parent=27 // pred_fallthru
        _
      %p751 = scmp.ge.s32.totalorder %s301, 1
      // Predicated region
      $region37: #{walker2d_losses.1} parent=27 // pred_check
        %p752 = pneg %p751
      $region38: #{walker2d_losses.1} parent=27 // pred_check_branch
        %754 = sbr.rel (%p752) target = $region40
      $region39: #{walker2d_losses.1} parent=27 // pred_region
        %s755 = smul.u32 %s301, 64
        %v756 = vlaneseq
        %v757 = vshrl.u32 %v756, 7
        %v758 = vadd.s32 %v757, 8
        %v759 = vadd.s32 %v757, 16
        %v760 = vadd.s32 %v757, 24
        %v761 = vadd.s32 %v757, 32
        %v762 = vadd.s32 %v757, 40
        %v763 = vadd.s32 %v757, 48
        %v764 = vadd.s32 %v757, 56
        %v765 = vstv %s755
        %v766 = vadd.s32 %v765, %v757
        %v767 = vadd.s32 %v765, %v758
        %v768 = vadd.s32 %v765, %v759
        %v769 = vadd.s32 %v765, %v760
        %v770 = vadd.s32 %v765, %v761
        %v771 = vadd.s32 %v765, %v762
        %v772 = vadd.s32 %v765, %v763
        %v773 = vadd.s32 %v765, %v764
        %vm774 = vcmp.lt.s32.totalorder %v766, 65
        %vm775 = vcmp.lt.s32.totalorder %v767, 65
        %vm776 = vcmp.lt.s32.totalorder %v768, 65
        %vm777 = vcmp.lt.s32.totalorder %v769, 65
        %vm778 = vcmp.lt.s32.totalorder %v770, 65
        %vm779 = vcmp.lt.s32.totalorder %v771, 65
        %vm780 = vcmp.lt.s32.totalorder %v772, 65
        %vm781 = vcmp.lt.s32.totalorder %v773, 65
        %v782 = vsel %vm774, %v446, 0.0
        %v783 = vsel %vm774, %v447, 0.0
        %v784 = vsel %vm774, %v448, 0.0
        %v785 = vsel %vm774, %v449, 0.0
        %v786 = vsel %vm774, %v450, 0.0
        %v787 = vsel %vm774, %v451, 0.0
        %v788 = vsel %vm774, %v452, 0.0
        %v789 = vsel %vm774, %v453, 0.0
        %v790 = vsel %vm774, %v454, 0.0
        %v791 = vsel %vm775, %v455, 0.0
        %v792 = vsel %vm775, %v456, 0.0
        %v793 = vsel %vm775, %v457, 0.0
        %v794 = vsel %vm775, %v458, 0.0
        %v795 = vsel %vm775, %v459, 0.0
        %v796 = vsel %vm775, %v460, 0.0
        %v797 = vsel %vm775, %v461, 0.0
        %v798 = vsel %vm775, %v462, 0.0
        %v799 = vsel %vm775, %v463, 0.0
        %v800 = vsel %vm776, %v464, 0.0
        %v801 = vsel %vm776, %v465, 0.0
        %v802 = vsel %vm776, %v466, 0.0
        %v803 = vsel %vm776, %v467, 0.0
        %v804 = vsel %vm776, %v468, 0.0
        %v805 = vsel %vm776, %v469, 0.0
        %v806 = vsel %vm776, %v470, 0.0
        %v807 = vsel %vm776, %v471, 0.0
        %v808 = vsel %vm776, %v472, 0.0
        %v809 = vsel %vm777, %v473, 0.0
        %v810 = vsel %vm777, %v474, 0.0
        %v811 = vsel %vm777, %v475, 0.0
        %v812 = vsel %vm777, %v476, 0.0
        %v813 = vsel %vm777, %v477, 0.0
        %v814 = vsel %vm777, %v478, 0.0
        %v815 = vsel %vm777, %v479, 0.0
        %v816 = vsel %vm777, %v480, 0.0
        %v817 = vsel %vm777, %v481, 0.0
        %v818 = vsel %vm778, %v482, 0.0
        %v819 = vsel %vm778, %v483, 0.0
        %v820 = vsel %vm778, %v484, 0.0
        %v821 = vsel %vm778, %v485, 0.0
        %v822 = vsel %vm778, %v486, 0.0
        %v823 = vsel %vm778, %v487, 0.0
        %v824 = vsel %vm778, %v488, 0.0
        %v825 = vsel %vm778, %v489, 0.0
        %v826 = vsel %vm778, %v490, 0.0
        %v827 = vsel %vm779, %v491, 0.0
        %v828 = vsel %vm779, %v492, 0.0
        %v829 = vsel %vm779, %v493, 0.0
        %v830 = vsel %vm779, %v494, 0.0
        %v831 = vsel %vm779, %v495, 0.0
        %v832 = vsel %vm779, %v496, 0.0
        %v833 = vsel %vm779, %v497, 0.0
        %v834 = vsel %vm779, %v498, 0.0
        %v835 = vsel %vm779, %v499, 0.0
        %v836 = vsel %vm780, %v500, 0.0
        %v837 = vsel %vm780, %v501, 0.0
        %v838 = vsel %vm780, %v502, 0.0
        %v839 = vsel %vm780, %v503, 0.0
        %v840 = vsel %vm780, %v504, 0.0
        %v841 = vsel %vm780, %v505, 0.0
        %v842 = vsel %vm780, %v506, 0.0
        %v843 = vsel %vm780, %v507, 0.0
        %v844 = vsel %vm780, %v508, 0.0
        %v845 = vsel %vm781, %v509, 0.0
        %v846 = vsel %vm781, %v510, 0.0
        %v847 = vsel %vm781, %v511, 0.0
        %v848 = vsel %vm781, %v512, 0.0
        %v849 = vsel %vm781, %v513, 0.0
        %v850 = vsel %vm781, %v514, 0.0
        %v851 = vsel %vm781, %v515, 0.0
        %v852 = vsel %vm781, %v516, 0.0
        %v853 = vsel %vm781, %v517, 0.0
        %v854 = vld [vmem:[#allocation2] sm:$0xff]
        %v855 = vld [vmem:[#allocation2 + $0x8] sm:$0x1]
        %v856 = vmul.f32 %v782, %v782
        %v857 = vmul.f32 %v783, %v783
        %v858 = vmul.f32 %v784, %v784
        %v859 = vmul.f32 %v785, %v785
        %v860 = vmul.f32 %v786, %v786
        %v861 = vmul.f32 %v787, %v787
        %v862 = vmul.f32 %v788, %v788
        %v863 = vmul.f32 %v789, %v789
        %v864 = vmul.f32 %v790, %v790
        %v865 = vmul.f32 %v791, %v791
        %v866 = vmul.f32 %v792, %v792
        %v867 = vmul.f32 %v793, %v793
        %v868 = vmul.f32 %v794, %v794
        %v869 = vmul.f32 %v795, %v795
        %v870 = vmul.f32 %v796, %v796
        %v871 = vmul.f32 %v797, %v797
        %v872 = vmul.f32 %v798, %v798
        %v873 = vmul.f32 %v799, %v799
        %v874 = vmul.f32 %v800, %v800
        %v875 = vmul.f32 %v801, %v801
        %v876 = vmul.f32 %v802, %v802
        %v877 = vmul.f32 %v803, %v803
        %v878 = vmul.f32 %v804, %v804
        %v879 = vmul.f32 %v805, %v805
        %v880 = vmul.f32 %v806, %v806
        %v881 = vmul.f32 %v807, %v807
        %v882 = vmul.f32 %v808, %v808
        %v883 = vmul.f32 %v809, %v809
        %v884 = vmul.f32 %v810, %v810
        %v885 = vmul.f32 %v811, %v811
        %v886 = vmul.f32 %v812, %v812
        %v887 = vmul.f32 %v813, %v813
        %v888 = vmul.f32 %v814, %v814
        %v889 = vmul.f32 %v815, %v815
        %v890 = vmul.f32 %v816, %v816
        %v891 = vmul.f32 %v817, %v817
        %v892 = vmul.f32 %v818, %v818
        %v893 = vmul.f32 %v819, %v819
        %v894 = vmul.f32 %v820, %v820
        %v895 = vmul.f32 %v821, %v821
        %v896 = vmul.f32 %v822, %v822
        %v897 = vmul.f32 %v823, %v823
        %v898 = vmul.f32 %v824, %v824
        %v899 = vmul.f32 %v825, %v825
        %v900 = vmul.f32 %v826, %v826
        %v901 = vmul.f32 %v827, %v827
        %v902 = vmul.f32 %v828, %v828
        %v903 = vmul.f32 %v829, %v829
        %v904 = vmul.f32 %v830, %v830
        %v905 = vmul.f32 %v831, %v831
        %v906 = vmul.f32 %v832, %v832
        %v907 = vmul.f32 %v833, %v833
        %v908 = vmul.f32 %v834, %v834
        %v909 = vmul.f32 %v835, %v835
        %v910 = vmul.f32 %v836, %v836
        %v911 = vmul.f32 %v837, %v837
        %v912 = vmul.f32 %v838, %v838
        %v913 = vmul.f32 %v839, %v839
        %v914 = vmul.f32 %v840, %v840
        %v915 = vmul.f32 %v841, %v841
        %v916 = vmul.f32 %v842, %v842
        %v917 = vmul.f32 %v843, %v843
        %v918 = vmul.f32 %v844, %v844
        %v919 = vmul.f32 %v845, %v845
        %v920 = vmul.f32 %v846, %v846
        %v921 = vmul.f32 %v847, %v847
        %v922 = vmul.f32 %v848, %v848
        %v923 = vmul.f32 %v849, %v849
        %v924 = vmul.f32 %v850, %v850
        %v925 = vmul.f32 %v851, %v851
        %v926 = vmul.f32 %v852, %v852
        %v927 = vmul.f32 %v853, %v853
        %v928 = vadd.f32 %v856, %v865
        %v929 = vadd.f32 %v928, %v874
        %v930 = vadd.f32 %v929, %v883
        %v931 = vadd.f32 %v930, %v892
        %v932 = vadd.f32 %v931, %v901
        %v933 = vadd.f32 %v932, %v910
        %v934 = vadd.f32 %v933, %v919
        %v935 = vrot.slane %v934, 4
        %v936 = vadd.f32 %v934, %v935
        %v937 = vrot.slane %v936, 2
        %v938 = vadd.f32 %v936, %v937
        %v939 = vrot.slane %v938, 1
        %v940 = vadd.f32 %v938, %v939
        %v941 = vadd.f32 %v857, %v866
        %v942 = vadd.f32 %v941, %v875
        %v943 = vadd.f32 %v942, %v884
        %v944 = vadd.f32 %v943, %v893
        %v945 = vadd.f32 %v944, %v902
        %v946 = vadd.f32 %v945, %v911
        %v947 = vadd.f32 %v946, %v920
        %v948 = vrot.slane %v947, 4
        %v949 = vadd.f32 %v947, %v948
        %v950 = vrot.slane %v949, 2
        %v951 = vadd.f32 %v949, %v950
        %v952 = vrot.slane %v951, 1
        %v953 = vadd.f32 %v951, %v952
        %v954 = vadd.f32 %v858, %v867
        %v955 = vadd.f32 %v954, %v876
        %v956 = vadd.f32 %v955, %v885
        %v957 = vadd.f32 %v956, %v894
        %v958 = vadd.f32 %v957, %v903
        %v959 = vadd.f32 %v958, %v912
        %v960 = vadd.f32 %v959, %v921
        %v961 = vrot.slane %v960, 4
        %v962 = vadd.f32 %v960, %v961
        %v963 = vrot.slane %v962, 2
        %v964 = vadd.f32 %v962, %v963
        %v965 = vrot.slane %v964, 1
        %v966 = vadd.f32 %v964, %v965
        %v967 = vadd.f32 %v859, %v868
        %v968 = vadd.f32 %v967, %v877
        %v969 = vadd.f32 %v968, %v886
        %v970 = vadd.f32 %v969, %v895
        %v971 = vadd.f32 %v970, %v904
        %v972 = vadd.f32 %v971, %v913
        %v973 = vadd.f32 %v972, %v922
        %v974 = vrot.slane %v973, 4
        %v975 = vadd.f32 %v973, %v974
        %v976 = vrot.slane %v975, 2
        %v977 = vadd.f32 %v975, %v976
        %v978 = vrot.slane %v977, 1
        %v979 = vadd.f32 %v977, %v978
        %v980 = vadd.f32 %v860, %v869
        %v981 = vadd.f32 %v980, %v878
        %v982 = vadd.f32 %v981, %v887
        %v983 = vadd.f32 %v982, %v896
        %v984 = vadd.f32 %v983, %v905
        %v985 = vadd.f32 %v984, %v914
        %v986 = vadd.f32 %v985, %v923
        %v987 = vrot.slane %v986, 4
        %v988 = vadd.f32 %v986, %v987
        %v989 = vrot.slane %v988, 2
        %v990 = vadd.f32 %v988, %v989
        %v991 = vrot.slane %v990, 1
        %v992 = vadd.f32 %v990, %v991
        %v993 = vadd.f32 %v861, %v870
        %v994 = vadd.f32 %v993, %v879
        %v995 = vadd.f32 %v994, %v888
        %v996 = vadd.f32 %v995, %v897
        %v997 = vadd.f32 %v996, %v906
        %v998 = vadd.f32 %v997, %v915
        %v999 = vadd.f32 %v998, %v924
        %v1000 = vrot.slane %v999, 4
        %v1001 = vadd.f32 %v999, %v1000
        %v1002 = vrot.slane %v1001, 2
        %v1003 = vadd.f32 %v1001, %v1002
        %v1004 = vrot.slane %v1003, 1
        %v1005 = vadd.f32 %v1003, %v1004
        %v1006 = vadd.f32 %v862, %v871
        %v1007 = vadd.f32 %v1006, %v880
        %v1008 = vadd.f32 %v1007, %v889
        %v1009 = vadd.f32 %v1008, %v898
        %v1010 = vadd.f32 %v1009, %v907
        %v1011 = vadd.f32 %v1010, %v916
        %v1012 = vadd.f32 %v1011, %v925
        %v1013 = vrot.slane %v1012, 4
        %v1014 = vadd.f32 %v1012, %v1013
        %v1015 = vrot.slane %v1014, 2
        %v1016 = vadd.f32 %v1014, %v1015
        %v1017 = vrot.slane %v1016, 1
        %v1018 = vadd.f32 %v1016, %v1017
        %v1019 = vadd.f32 %v863, %v872
        %v1020 = vadd.f32 %v1019, %v881
        %v1021 = vadd.f32 %v1020, %v890
        %v1022 = vadd.f32 %v1021, %v899
        %v1023 = vadd.f32 %v1022, %v908
        %v1024 = vadd.f32 %v1023, %v917
        %v1025 = vadd.f32 %v1024, %v926
        %v1026 = vrot.slane %v1025, 4
        %v1027 = vadd.f32 %v1025, %v1026
        %v1028 = vrot.slane %v1027, 2
        %v1029 = vadd.f32 %v1027, %v1028
        %v1030 = vrot.slane %v1029, 1
        %v1031 = vadd.f32 %v1029, %v1030
        %v1032 = vadd.f32 %v864, %v873
        %v1033 = vadd.f32 %v1032, %v882
        %v1034 = vadd.f32 %v1033, %v891
        %v1035 = vadd.f32 %v1034, %v900
        %v1036 = vadd.f32 %v1035, %v909
        %v1037 = vadd.f32 %v1036, %v918
        %v1038 = vadd.f32 %v1037, %v927
        %v1039 = vrot.slane %v1038, 4
        %v1040 = vadd.f32 %v1038, %v1039
        %v1041 = vrot.slane %v1040, 2
        %v1042 = vadd.f32 %v1040, %v1041
        %v1043 = vrot.slane %v1042, 1
        %v1044 = vadd.f32 %v1042, %v1043
        %v1053 = vrot.slane %v953, 7
        %v1054 = vrot.slane %v966, 6
        %v1055 = vrot.slane %v979, 5
        %v1056 = vrot.slane %v992, 4
        %v1057 = vrot.slane %v1005, 3
        %v1058 = vrot.slane %v1018, 2
        %v1059 = vrot.slane %v1031, 1
        %vm1060 = vcmask 1040384
        %v1061 = vsel %vm1060, %v940, %v1053
        %vm1062 = vcmask 1042434
        %v1063 = vsel %vm1062, %v1054, %v1055
        %vm1064 = vcmask 1041408
        %v1065 = vsel %vm1064, %v1061, %v1063
        %vm1066 = vcmask 1044484
        %v1067 = vsel %vm1066, %v1056, %v1057
        %vm1068 = vcmask 1046534
        %v1069 = vsel %vm1068, %v1058, %v1059
        %vm1070 = vcmask 1045508
        %v1071 = vsel %vm1070, %v1067, %v1069
        %vm1072 = vcmask 1043456
        %v1073 = vsel %vm1072, %v1065, %v1071
        %v1075 = vadd.f32 %v854, %v1073
        %v1076 = vadd.f32 %v855, %v1044
        %1077 = vst [vmem:[#allocation2] sm:$0xff] %v1075
        %v1078 = vlaneseq
        %vm1079 = vcmp.ge.s32.totalorder %v1078, 0
        %vm1080 = vcmp.lt.s32.totalorder %v1078, 128
        %vm1081 = vmand %vm1079, %vm1080
        %1082 = vst.msk [vmem:[#allocation2 + $0x8] sm:$0x1] %vm1081, %v1076
      $region40: #{walker2d_losses.1} parent=27 // pred_fallthru
        _
      %p1083 = scmp.eq.s32.totalorder %s18, 1
      // Predicated region
      $region41: #{walker2d_losses.1} parent=27 // pred_check
        %p1084 = pneg %p1083
      $region42: #{walker2d_losses.1} parent=27 // pred_check_branch
        %1086 = sbr.rel (%p1084) target = $region44
      $region43: #{walker2d_losses.1} parent=27 // pred_region
        %v1087 = vld [vmem:[#allocation2] sm:$0xff]
        %v1088 = vld [vmem:[#allocation2 + $0x8] sm:$0x1]
        %1089 = vst [vmem:[%s289] sm:$0xff] %v1087
        %v1090 = vlaneseq
        %vm1091 = vcmp.ge.s32.totalorder %v1090, 0
        %vm1092 = vcmp.lt.s32.totalorder %v1090, 128
        %vm1093 = vmand %vm1091, %vm1092
        %1094 = vst.msk [vmem:[%s289 + $0x8] sm:$0x1] %vm1093, %v1088
      $region44: #{walker2d_losses.1} parent=27 // pred_fallthru
        _
      %p1095 = scmp.lt.s32.totalorder %s17, 0
      %s1096 = scalar_select %p1095, %s17, 0
      %s1097 = smul.addr %s1096, 9
      %s1098 = scalar_lea.vmem %s2, %s1097
      // Predicated region
      $region45: #{walker2d_losses.1} parent=27 // pred_check
        %p1099 = pneg %p111
      $region46: #{walker2d_losses.1} parent=27 // pred_check_branch
        %1101 = sbr.rel (%p1099) target = $region48
      $region47: #{walker2d_losses.1} parent=27 // pred_region
        _
      $region48: #{walker2d_losses.1} parent=27 // pred_fallthru
        _
      // Predicated region
      $region49: #{walker2d_losses.1} parent=27 // pred_check
        %p1102 = pneg %p111
      $region50: #{walker2d_losses.1} parent=27 // pred_check_branch
        %1104 = sbr.rel (%p1102) target = $region52
      $region51: #{walker2d_losses.1} parent=27 // pred_region
        %p1105 = scmp.lt.s32.totalorder %s17, 0
        %s1106 = scalar_select %p1105, %s17, 0
        %s1107 = smul.addr %s1106, 9
        %s1108 = scalar_lea.vmem %s2, %s1107
      $region52: #{walker2d_losses.1} parent=27 // pred_fallthru
        _
    $region28: #{walker2d_losses.1} parent=5 // pred_fallthru
      _
    %p1109 = scmp.le.s32.totalorder 2, %s8
    // Predicated region
    $region53: #{walker2d_losses.1} parent=5 // pred_check
      %p1110 = pneg %p1109
    $region54: #{walker2d_losses.1} parent=5 // pred_check_branch
      %1112 = sbr.rel (%p1110) target = $region56
    $region55: #{walker2d_losses.1} parent=5 // pred_region
      %s1113 = ssub.s32 %s8, 2
    $region56: #{walker2d_losses.1} parent=5 // pred_fallthru
      _
  $region6: #{walker2d_losses.1} parent=0 // loop_footer
    %s12 = sadd.s32 1, %s8
  $region7: #{walker2d_losses.1} parent=0 // loop_footer_branch
    %7 = sbr.rel target = $region3
  $region8: #{walker2d_losses.1} parent=0 // loop_exit
    _

</llo_original>
